<compile_context>
chip_gen: v7x
topology: tpu7x:2x2x1
jax: 0.10.0
libtpu: 0.0.40
codegen_flags: <defaults>
</compile_context>

<pallas_src>
import jax
import jax.numpy as jnp
from jax.experimental import pallas as pl
from jax.experimental.pallas import tpu as pltpu

# ---------------- model hyper-params (synthetic YOLO11-like head) -------------
STRIDE = 8                      # single detection scale, stride 8
C_IN = 3                        # RGB input
HIDDEN = 128                    # head hidden width (must be 128 for bias pack)
N_BOX = 4                       # cxcywh -> xyxy
N_CLS = 80                      # COCO classes
PATCH_DIM = C_IN * STRIDE * STRIDE   # 192  (no K padding; full-extent block dim)
OUT_PAD = 128                   # lane-dense fused output width (84 -> 128)

assert HIDDEN == OUT_PAD, "bias packing assumes HIDDEN == OUT_PAD == 128"


# --------------------------------- kernel ------------------------------------
def _yolo_head_kernel(patch_ref, w1_ref, w2_ref, bias_ref, out_ref):
    """h   = SiLU(patch @ W1 + b1)                      (bf16 matmul, f32 acc)
       out = h @ W2_fused + b2_fused                    (xyxy map pre-folded)
       out cols: [0:4] boxes_xyxy, [4:84] scores, [84:128] zero pad.
       Output is stored lane-dense in bf16 (full 128-lane unmasked stores).
    """
    x = patch_ref[...]                                            # (tm, 192) bf16
    h = jnp.dot(x, w1_ref[...], preferred_element_type=jnp.float32)
    h = h + bias_ref[0:1, :]                                      # f32 bias
    h = h * jax.nn.sigmoid(h)                                     # SiLU in f32 (EUP)
    out = jnp.dot(h.astype(jnp.bfloat16), w2_ref[...],
                  preferred_element_type=jnp.float32)             # (tm, 128)
    out_ref[...] = (out + bias_ref[1:2, :]).astype(out_ref.dtype)


# ------------------------------ param handling --------------------------------
def init_params(key):
    """Deterministic synthetic head parameters (raw, un-folded)."""
    k1, k2, k3, k4 = jax.random.split(key, 4)
    w1 = jax.random.normal(k1, (PATCH_DIM, HIDDEN), jnp.float32) * 0.05
    b1 = jax.random.normal(k2, (1, HIDDEN), jnp.float32) * 0.01
    # single (HIDDEN, 84) head weight, then split([4, 80]) like the PyTorch module.
    w2 = jax.random.normal(k3, (HIDDEN, N_BOX + N_CLS), jnp.float32) * 0.05
    b2 = jax.random.normal(k4, (1, N_BOX + N_CLS), jnp.float32) * 0.01
    w2b, w2s = w2[:, :N_BOX], w2[:, N_BOX:]
    b2b, b2s = b2[:, :N_BOX], b2[:, N_BOX:]
    return (w1, b1, w2b, b2b, w2s, b2s)


def _fold_params(params):
    """Fold cxcywh->xyxy into the box head, fuse box/cls heads into one
    lane-dense (HIDDEN, 128) weight, pack both biases into one (2, 128)."""
    w1, b1, w2b, b2b, w2s, b2s = params
    # [x1,y1,x2,y2] = [cx,cy,w,h] @ M
    conv = jnp.array([[1.0, 0.0, 1.0, 0.0],
                      [0.0, 1.0, 0.0, 1.0],
                      [-0.5, 0.0, 0.5, 0.0],
                      [0.0, -0.5, 0.0, 0.5]], dtype=jnp.float32)
    w2_box = w2b @ conv                                   # (HIDDEN, 4)
    b2_box = b2b @ conv                                   # (1, 4)

    w2_full = jnp.zeros((HIDDEN, OUT_PAD), jnp.float32)
    w2_full = w2_full.at[:, :N_BOX].set(w2_box)
    w2_full = w2_full.at[:, N_BOX:N_BOX + N_CLS].set(w2s)

    b2_full = jnp.zeros((1, OUT_PAD), jnp.float32)
    b2_full = b2_full.at[:, :N_BOX].set(b2_box)
    b2_full = b2_full.at[:, N_BOX:N_BOX + N_CLS].set(b2s)

    bias = jnp.concatenate([b1, b2_full], axis=0)         # (2, 128) f32
    return w1.astype(jnp.bfloat16), w2_full.astype(jnp.bfloat16), bias


def _choose_tm(bn, requested=None):
    """Anchor tile: multiple of 16 (bf16 sublane pack), capped at 2048 rows
    (review: kernel is HBM/overhead bound; big tiles amortize the ~0.35 us
    per-step cost), while preferring >= 2 grid steps so the pipeline has
    something to overlap and the 'parallel' axis can be sharded on v7x."""
    if requested is not None:
        tm = max(16, (requested // 16) * 16)
    else:
        tm = 2048
        half = ((bn // 2) // 16) * 16
        if half >= 16:
            tm = min(tm, half)
    # never request a block much bigger than the anchor count
    tm = min(tm, max(16, ((bn + 15) // 16) * 16))
    return tm


# -------------------------------- forward -------------------------------------
def yolo11_forward(x, params, *, tm=None):
    """x: (B, C_IN, H, W) float32 NCHW.  Returns (boxes (B,N,4), scores (B,N,80))."""
    B, C, H, W = x.shape
    assert C == C_IN and H % STRIDE == 0 and W % STRIDE == 0
    hs, ws = H // STRIDE, W // STRIDE
    N = hs * ws                                   # anchors (single scale)
    BN = B * N

    # ---- space-to-depth "backbone stem" (pure layout, no compute) ----
    # Cast to bf16 *before* the transpose so the materialized patches copy is
    # half-size; run under jit so XLA fuses cast+transpose into one pass.
    # TODO(synk): fuse the stem into the kernel via a BlockSpec over raw NCHW
    # input to avoid this HBM round trip entirely.
    xb = x.astype(jnp.bfloat16)
    patches = xb.reshape(B, C, hs, STRIDE, ws, STRIDE)
    patches = patches.transpose(0, 2, 4, 1, 3, 5)          # (B, hs, ws, C, s, s)
    patches = patches.reshape(BN, PATCH_DIM)               # rows = anchors, bf16

    tm = _choose_tm(BN, tm)
    grid_steps = pl.cdiv(BN, tm)                  # ragged last block: Pallas
    grid = (grid_steps,)                          # masks OOB stores; rows are
                                                  # independent so no explicit
                                                  # tail padding is needed.
    w1_p, w2_p, bias_p = _fold_params(params)

    bn_proc = grid_steps * tm
    cost = pl.CostEstimate(
        flops=2 * bn_proc * (PATCH_DIM * HIDDEN + HIDDEN * OUT_PAD),
        transcendentals=bn_proc * HIDDEN,
        bytes_accessed=(bn_proc * PATCH_DIM * 2       # patches in  (bf16)
                        + bn_proc * OUT_PAD * 2       # fused out   (bf16)
                        + PATCH_DIM * HIDDEN * 2      # W1 (once)
                        + HIDDEN * OUT_PAD * 2        # W2 (once)
                        + 2 * OUT_PAD * 4),           # biases (once)
    )

    out = pl.pallas_call(
        _yolo_head_kernel,
        out_shape=jax.ShapeDtypeStruct((BN, OUT_PAD), jnp.bfloat16),
        grid_spec=pltpu.PrefetchScalarGridSpec(
            num_scalar_prefetch=0,
            grid=grid,
            in_specs=[
                # (tm, 192): last dim is the full array extent -> satisfies
                # the (8,128) rule without zero-padding K.
                pl.BlockSpec((tm, PATCH_DIM), lambda i: (i, 0)),       # patches
                # constant-index blocks -> DMA'd once, resident across steps
                pl.BlockSpec((PATCH_DIM, HIDDEN), lambda i: (0, 0)),   # W1
                pl.BlockSpec((HIDDEN, OUT_PAD), lambda i: (0, 0)),     # W2 fused
                pl.BlockSpec((2, OUT_PAD), lambda i: (0, 0)),          # biases
            ],
            out_specs=pl.BlockSpec((tm, OUT_PAD), lambda i: (i, 0)),
        ),
        compiler_params=pltpu.CompilerParams(
            # NOTE: if profiling on v7x shows a single active TC, switch this
            # axis to pltpu.CORE_PARALLEL.
            dimension_semantics=("parallel",),
            vmem_limit_bytes=32 * 1024 * 1024,
        ),
        cost_estimate=cost,
    )(patches, w1_p, w2_p, bias_p)

    boxes = out[:, :N_BOX].astype(jnp.float32).reshape(B, N, N_BOX)
    scores = out[:, N_BOX:N_BOX + N_CLS].astype(jnp.float32).reshape(B, N, N_CLS)
    return boxes, scores


# ------------------------------- reference ------------------------------------
def _reference(x, params):
    """Pure-JAX f32 reference mirroring the PyTorch semantics."""
    w1, b1, w2b, b2b, w2s, b2s = params
    B, C, H, W = x.shape
    hs, ws = H // STRIDE, W // STRIDE
    patches = x.reshape(B, C, hs, STRIDE, ws, STRIDE).transpose(0, 2, 4, 1, 3, 5)
    patches = patches.reshape(B, hs * ws, PATCH_DIM)
    h = patches @ w1 + b1
    h = h * jax.nn.sigmoid(h)
    pred = jnp.concatenate([h @ w2b + b2b, h @ w2s + b2s], axis=-1)   # (B, N, 84)
    boxes_c, scores = pred[..., :N_BOX], pred[..., N_BOX:]
    cx, cy, w, hh = (boxes_c[..., 0], boxes_c[..., 1],
                     boxes_c[..., 2], boxes_c[..., 3])
    boxes = jnp.stack([cx - w / 2, cy - hh / 2, cx + w / 2, cy + hh / 2], axis=-1)
    return boxes, scores


if __name__ == "__main__":
    key = jax.random.PRNGKey(0)
    kx, kp = jax.random.split(key)
    x = jax.random.normal(kx, (2, C_IN, 32, 32), jnp.float32)    # B=2, 32x32 image
    params = init_params(kp)

    fwd = jax.jit(yolo11_forward, static_argnames=("tm",))
    boxes, scores = fwd(x, params)
    jax.block_until_ready((boxes, scores))

    ref_boxes, ref_scores = _reference(x, params)
    assert boxes.shape == (2, 16, 4) and scores.shape == (2, 16, 80)
    # bf16 matmul operands + bf16 output vs f32 reference -> relaxed tolerance
    assert jnp.allclose(boxes, ref_boxes, atol=3e-2, rtol=3e-2)
    assert jnp.allclose(scores, ref_scores, atol=3e-2, rtol=3e-2)

    print("KERNEL_OK")
</pallas_src>

<mosaic_0001>
module attributes {stable_mosaic.version = 11 : i64} {
  func.func @_yolo_head_kernel(%arg0: i32, %arg1: memref<16x192xbf16, #tpu.memory_space<vmem>>, %arg2: memref<192x128xbf16, #tpu.memory_space<vmem>>, %arg3: memref<128x128xbf16, #tpu.memory_space<vmem>>, %arg4: memref<2x128xf32, #tpu.memory_space<vmem>>, %arg5: memref<16x128xbf16, #tpu.memory_space<vmem>>) attributes {dimension_semantics = [#tpu.dimension_semantics<parallel>], iteration_bounds = array<i64: 2>, scalar_prefetch = 0 : i64, scratch_operands = 0 : i64, tpu.core_type = #tpu.core_type<tc>, window_params = [{transform_indices = @transform_0, window_bounds = array<i64: 16, 192>}, {pipeline_mode = #tpu.pipeline_mode<synchronous>, transform_indices = @transform_1, window_bounds = array<i64: 192, 128>}, {pipeline_mode = #tpu.pipeline_mode<synchronous>, transform_indices = @transform_2, window_bounds = array<i64: 128, 128>}, {pipeline_mode = #tpu.pipeline_mode<synchronous>, transform_indices = @transform_3, window_bounds = array<i64: 2, 128>}, {transform_indices = @transform_4, window_bounds = array<i64: 16, 128>}]} {
    %c0 = arith.constant 0 : index
    %c0_0 = arith.constant 0 : index
    %0 = vector.load %arg1[%c0, %c0_0] : memref<16x192xbf16, #tpu.memory_space<vmem>>, vector<16x192xbf16>
    %c0_1 = arith.constant 0 : index
    %c0_2 = arith.constant 0 : index
    %1 = vector.load %arg2[%c0_1, %c0_2] : memref<192x128xbf16, #tpu.memory_space<vmem>>, vector<192x128xbf16>
    %cst = arith.constant dense<0.000000e+00> : vector<16x128xf32>
    %2 = tpu.matmul %0, %1, %cst {dimension_numbers = #tpu.dot_dimension_numbers<[1], [0], [0], [1], [0, 0, 1, 1], [], []>} : vector<16x192xbf16>, vector<192x128xbf16>, vector<16x128xf32> -> vector<16x128xf32>
    %c0_3 = arith.constant 0 : index
    %c0_4 = arith.constant 0 : index
    %3 = vector.load %arg4[%c0_3, %c0_4] : memref<2x128xf32, #tpu.memory_space<vmem>>, vector<1x128xf32>
    %4 = vector.broadcast %3 : vector<1x128xf32> to vector<16x128xf32>
    %5 = arith.addf %2, %4 : vector<16x128xf32>
    %6 = arith.negf %5 : vector<16x128xf32>
    %7 = math.exp %6 : vector<16x128xf32>
    %cst_5 = arith.constant 1.000000e+00 : f32
    %8 = vector.broadcast %cst_5 : f32 to vector<16x128xf32>
    %9 = arith.addf %8, %7 : vector<16x128xf32>
    %10 = arith.divf %8, %9 : vector<16x128xf32>
    %11 = arith.mulf %5, %10 : vector<16x128xf32>
    %12 = arith.truncf %11 : vector<16x128xf32> to vector<16x128xbf16>
    %c0_6 = arith.constant 0 : index
    %c0_7 = arith.constant 0 : index
    %13 = vector.load %arg3[%c0_6, %c0_7] : memref<128x128xbf16, #tpu.memory_space<vmem>>, vector<128x128xbf16>
    %cst_8 = arith.constant dense<0.000000e+00> : vector<16x128xf32>
    %14 = tpu.matmul %12, %13, %cst_8 {dimension_numbers = #tpu.dot_dimension_numbers<[1], [0], [0], [1], [0, 0, 1, 1], [], []>} : vector<16x128xbf16>, vector<128x128xbf16>, vector<16x128xf32> -> vector<16x128xf32>
    %c1 = arith.constant 1 : index
    %c0_9 = arith.constant 0 : index
    %15 = vector.load %arg4[%c1, %c0_9] : memref<2x128xf32, #tpu.memory_space<vmem>>, vector<1x128xf32>
    %16 = vector.broadcast %15 : vector<1x128xf32> to vector<16x128xf32>
    %17 = arith.addf %14, %16 : vector<16x128xf32>
    %18 = arith.truncf %17 : vector<16x128xf32> to vector<16x128xbf16>
    %c0_10 = arith.constant 0 : index
    %c0_11 = arith.constant 0 : index
    %19 = vector.load %arg5[%c0_10, %c0_11] : memref<16x128xbf16, #tpu.memory_space<vmem>>, vector<16x128xbf16>
    tpu.vector_store %arg5[%c0_10, %c0_11], %18 {strides = array<i32>} : memref<16x128xbf16, #tpu.memory_space<vmem>>, vector<16x128xbf16>,
    return
  }
  func.func @transform_0(%arg0: i32) -> (i32, i32) {
    %c0_i32 = arith.constant 0 : i32
    %c0_i32_0 = arith.constant 0 : i32
    return %arg0, %c0_i32 : i32, i32
  }
  func.func @transform_1(%arg0: i32) -> (i32, i32) {
    %c0_i32 = arith.constant 0 : i32
    %c0_i32_0 = arith.constant 0 : i32
    %c0_i32_1 = arith.constant 0 : i32
    return %c0_i32, %c0_i32_0 : i32, i32
  }
  func.func @transform_2(%arg0: i32) -> (i32, i32) {
    %c0_i32 = arith.constant 0 : i32
    %c0_i32_0 = arith.constant 0 : i32
    %c0_i32_1 = arith.constant 0 : i32
    return %c0_i32, %c0_i32_0 : i32, i32
  }
  func.func @transform_3(%arg0: i32) -> (i32, i32) {
    %c0_i32 = arith.constant 0 : i32
    %c0_i32_0 = arith.constant 0 : i32
    %c0_i32_1 = arith.constant 0 : i32
    return %c0_i32, %c0_i32_0 : i32, i32
  }
  func.func @transform_4(%arg0: i32) -> (i32, i32) {
    %c0_i32 = arith.constant 0 : i32
    %c0_i32_0 = arith.constant 0 : i32
    return %arg0, %c0_i32 : i32, i32
  }
}

</mosaic_0001>

<llo_original>
// kernel: yolo11_forward.1
$region0: #{yolo11_forward.1}
  #allocation0 [shape = 'u32[]', space=smem, size = 0x4, offset = 0x4, fixed_abs, tag = 'smem constant byte address 0x4 - core index']
  #allocation1 [shape = 'u32[144,128]{1,0:T(1,128)}', space=vmem, size = 0x12000, scoped, tag = 'internal scratch']
  %s0 = inlined_call_operand.vmem [shape: bf16[32,192], index: 0, kind: input, shape index: {}]
  %s1 = inlined_call_operand.vmem [shape: bf16[192,128], index: 1, kind: input, shape index: {}]
  %s2 = inlined_call_operand.vmem [shape: bf16[128,128], index: 2, kind: input, shape index: {}]
  %s3 = inlined_call_operand.vmem [shape: f32[2,128], index: 3, kind: input, shape index: {}]
  %s4 = inlined_call_operand.vmem [shape: bf16[32,128], index: 4, kind: output, shape index: {}]
  %s5 = sld [smem:[#allocation0]]
  $region49: #{yolo11_forward.1} parent=0
    _
  %s7 = ssub.s32 1, %s5
  %s8 = scalar_select 0, %s7, %s5
  loop: start=0, step=1, limit=4
  $region2: #{yolo11_forward.1} parent=0 // loop_pre_header
    _
  $region3: #{yolo11_forward.1} parent=0 // loop_header
    %s10 = sphi 0, %s14
    %p11 = scmp.ge.s32.totalorder %s10, 4
    %s20 = sphi 0, %s22
    %s23 = sphi 0, %s20
    %s24 = sphi 0, %s23
    %s40 = sphi 0, %s24
    %s44 = sphi 0, %s44
    %s46 = sphi 0, %s44
    %s47 = sphi 0, %s46
    %s61 = sphi 0, %s47
    %s65 = sphi 0, %s65
    %s67 = sphi 0, %s65
    %s68 = sphi 0, %s67
    %s82 = sphi 0, %s68
    %s86 = sphi 0, %s86
    %s88 = sphi 0, %s86
    %s89 = sphi 0, %s88
    %s103 = sphi 0, %s89
    %s109 = sphi 0, %s111
    %s112 = sphi 0, %s109
    %s113 = sphi 0, %s112
    %s129 = sphi 0, %s113
  $region4: #{yolo11_forward.1} parent=0 // loop_header_branch
    %13 = sbr.rel (%p11) target = $region8
  $region5: #{yolo11_forward.1} parent=0 // loop_body
    %s15 = ssub.s32 %s10, 1
    %s16 = ssub.s32 %s10, 2
    %s17 = sadd.s32 %s10, 1
    %s18 = ssub.s32 %s10, %s17
    %p19 = scmp.eq.s32.totalorder %s18, 0
    %s21 = sadd.s32 %s20, 1
    %s22 = scalar_select %p19, %s20, %s21
    %p25 = pneg %p19
    %p26 = scmp.eq.s32.totalorder %s10, 1
    %p27 = por %p25, %p26
    %p28 = scmp.ne.s32.totalorder %s20, %s23
    %p29 = scmp.eq.s32.totalorder %s10, 0
    %p30 = por %p28, %p29
    %p31 = scmp.ne.s32.totalorder %s20, %s23
    %p32 = scmp.eq.s32.totalorder %s15, 1
    %p33 = por %p31, %p32
    %p34 = scmp.ne.s32.totalorder %s23, %s24
    %p35 = scmp.eq.s32.totalorder %s15, 0
    %p36 = por %p34, %p35
    %p37 = scmp.ne.s32.totalorder %s23, %s24
    %p38 = scmp.eq.s32.totalorder %s16, 1
    %p39 = por %p37, %p38
    %p41 = scmp.ne.s32.totalorder %s24, %s40
    %p42 = scmp.eq.s32.totalorder %s16, 0
    %p43 = por %p41, %p42
    %s45 = sadd.s32 %s44, 1
    %p48 = scmp.eq.s32.totalorder %s10, 1
    %p49 = scmp.ne.s32.totalorder %s44, %s46
    %p50 = scmp.eq.s32.totalorder %s10, 0
    %p51 = por %p49, %p50
    %p52 = scmp.ne.s32.totalorder %s44, %s46
    %p53 = scmp.eq.s32.totalorder %s15, 1
    %p54 = por %p52, %p53
    %p55 = scmp.ne.s32.totalorder %s46, %s47
    %p56 = scmp.eq.s32.totalorder %s15, 0
    %p57 = por %p55, %p56
    %p58 = scmp.ne.s32.totalorder %s46, %s47
    %p59 = scmp.eq.s32.totalorder %s16, 1
    %p60 = por %p58, %p59
    %p62 = scmp.ne.s32.totalorder %s47, %s61
    %p63 = scmp.eq.s32.totalorder %s16, 0
    %p64 = por %p62, %p63
    %s66 = sadd.s32 %s65, 1
    %p69 = scmp.eq.s32.totalorder %s10, 1
    %p70 = scmp.ne.s32.totalorder %s65, %s67
    %p71 = scmp.eq.s32.totalorder %s10, 0
    %p72 = por %p70, %p71
    %p73 = scmp.ne.s32.totalorder %s65, %s67
    %p74 = scmp.eq.s32.totalorder %s15, 1
    %p75 = por %p73, %p74
    %p76 = scmp.ne.s32.totalorder %s67, %s68
    %p77 = scmp.eq.s32.totalorder %s15, 0
    %p78 = por %p76, %p77
    %p79 = scmp.ne.s32.totalorder %s67, %s68
    %p80 = scmp.eq.s32.totalorder %s16, 1
    %p81 = por %p79, %p80
    %p83 = scmp.ne.s32.totalorder %s68, %s82
    %p84 = scmp.eq.s32.totalorder %s16, 0
    %p85 = por %p83, %p84
    %s87 = sadd.s32 %s86, 1
    %p90 = scmp.eq.s32.totalorder %s10, 1
    %p91 = scmp.ne.s32.totalorder %s86, %s88
    %p92 = scmp.eq.s32.totalorder %s10, 0
    %p93 = por %p91, %p92
    %p94 = scmp.ne.s32.totalorder %s86, %s88
    %p95 = scmp.eq.s32.totalorder %s15, 1
    %p96 = por %p94, %p95
    %p97 = scmp.ne.s32.totalorder %s88, %s89
    %p98 = scmp.eq.s32.totalorder %s15, 0
    %p99 = por %p97, %p98
    %p100 = scmp.ne.s32.totalorder %s88, %s89
    %p101 = scmp.eq.s32.totalorder %s16, 1
    %p102 = por %p100, %p101
    %p104 = scmp.ne.s32.totalorder %s89, %s103
    %p105 = scmp.eq.s32.totalorder %s16, 0
    %p106 = por %p104, %p105
    %s107 = ssub.s32 %s10, %s17
    %p108 = scmp.eq.s32.totalorder %s107, 0
    %s110 = sadd.s32 %s109, 1
    %s111 = scalar_select %p108, %s109, %s110
    %p114 = pneg %p108
    %p115 = scmp.eq.s32.totalorder %s10, 1
    %p116 = por %p114, %p115
    %p117 = scmp.ne.s32.totalorder %s109, %s112
    %p118 = scmp.eq.s32.totalorder %s10, 0
    %p119 = por %p117, %p118
    %p120 = scmp.ne.s32.totalorder %s109, %s112
    %p121 = scmp.eq.s32.totalorder %s15, 1
    %p122 = por %p120, %p121
    %p123 = scmp.ne.s32.totalorder %s112, %s113
    %p124 = scmp.eq.s32.totalorder %s15, 0
    %p125 = por %p123, %p124
    %p126 = scmp.ne.s32.totalorder %s112, %s113
    %p127 = scmp.eq.s32.totalorder %s16, 1
    %p128 = por %p126, %p127
    %p130 = scmp.ne.s32.totalorder %s113, %s129
    %p131 = scmp.eq.s32.totalorder %s16, 0
    %p132 = por %p130, %p131
    %p133 = scmp.le.s32.totalorder 1, %s10
    %p134 = scmp.lt.s32.totalorder %s10, 3
    %p135 = pnand %p133, %p134
    %p136 = pneg %p135
    // Predicated region
    $region9: #{yolo11_forward.1} parent=5 // pred_check
      _
    $region10: #{yolo11_forward.1} parent=5 // pred_check_branch
      %138 = sbr.rel (%p135) target = $region12
    $region11: #{yolo11_forward.1} parent=5 // pred_region
      %s139 = ssub.s32 %s10, 1
      // Predicated region
      $region13: #{yolo11_forward.1} parent=11 // pred_check
        %p140 = pneg %p57
      $region14: #{yolo11_forward.1} parent=11 // pred_check_branch
        %142 = sbr.rel (%p140) target = $region16
      $region15: #{yolo11_forward.1} parent=11 // pred_region
        _
      $region16: #{yolo11_forward.1} parent=11 // pred_fallthru
        _
      // Predicated region
      $region17: #{yolo11_forward.1} parent=11 // pred_check
        %p143 = pneg %p78
      $region18: #{yolo11_forward.1} parent=11 // pred_check_branch
        %145 = sbr.rel (%p143) target = $region20
      $region19: #{yolo11_forward.1} parent=11 // pred_region
        _
      $region20: #{yolo11_forward.1} parent=11 // pred_fallthru
        _
      // Predicated region
      $region21: #{yolo11_forward.1} parent=11 // pred_check
        %p146 = pneg %p99
      $region22: #{yolo11_forward.1} parent=11 // pred_check_branch
        %148 = sbr.rel (%p146) target = $region24
      $region23: #{yolo11_forward.1} parent=11 // pred_region
        _
      $region24: #{yolo11_forward.1} parent=11 // pred_fallthru
        _
    $region12: #{yolo11_forward.1} parent=5 // pred_fallthru
      _
    %p149 = scmp.lt.s32.totalorder %s10, 2
    // Predicated region
    $region25: #{yolo11_forward.1} parent=5 // pred_check
      %p150 = pneg %p149
    $region26: #{yolo11_forward.1} parent=5 // pred_check_branch
      %152 = sbr.rel (%p150) target = $region28
    $region27: #{yolo11_forward.1} parent=5 // pred_region
      // Predicated region
      $region29: #{yolo11_forward.1} parent=27 // pred_check
        %p153 = pneg %p30
      $region30: #{yolo11_forward.1} parent=27 // pred_check_branch
        %155 = sbr.rel (%p153) target = $region32
      $region31: #{yolo11_forward.1} parent=27 // pred_region
        %s156 = smul.u32 2, %s10
        %p157 = scmp.lt.s32.totalorder %s156, 3
        %s158 = scalar_select %p157, %s156, 3
        %s159 = smul.addr %s158, 2
        %s160 = smul.addr %s159, 4
        %s161 = scalar_lea.vmem %s0, %s160
        %s162 = smul.u32 2, %s10
      $region32: #{yolo11_forward.1} parent=27 // pred_fallthru
        _
    $region28: #{yolo11_forward.1} parent=5 // pred_fallthru
      _
    %p163 = scmp.le.s32.totalorder 1, %s10
    %p164 = scmp.lt.s32.totalorder %s10, 3
    %p165 = pnand %p163, %p164
    %p166 = pneg %p165
    // Predicated region
    $region33: #{yolo11_forward.1} parent=5 // pred_check
      _
    $region34: #{yolo11_forward.1} parent=5 // pred_check_branch
      %168 = sbr.rel (%p165) target = $region36
    $region35: #{yolo11_forward.1} parent=5 // pred_region
      %s169 = ssub.s32 %s10, 1
      %s170 = smul.u32 2, %s15
      %p171 = scmp.lt.s32.totalorder %s170, 3
      %s172 = scalar_select %p171, %s170, 3
      %s173 = smul.addr %s172, 2
      %s174 = smul.addr %s173, 4
      %s175 = scalar_lea.vmem %s0, %s174
      %p176 = pneg %p36
      %p177 = pneg %p33
      %p178 = pneg %p57
      %p179 = pneg %p54
      %p180 = pneg %p78
      %p181 = pneg %p75
      %p182 = pneg %p99
      %p183 = pneg %p96
      %p184 = pneg %p125
      %p185 = pneg %p122
      %s186 = smul.u32 2, %s15
      %p187 = scmp.lt.s32.totalorder %s186, 3
      %s188 = scalar_select %p187, %s186, 3
      %s189 = smul.addr %s188, 4
      %s190 = scalar_lea.vmem %s4, %s189
      %s191 = smul.u32 2, %s15
      %p192 = scmp.lt.s32.totalorder %s191, 3
      %s193 = scalar_select %p192, %s191, 3
      %s194 = smul.addr %s193, 2
      %s195 = smul.addr %s194, 4
      %s196 = scalar_lea.vmem %s0, %s195
      %s197 = smul.u32 2, %s15
      %s198 = smul.u32 2, %s15
      %p199 = scmp.lt.s32.totalorder %s198, 3
      %s200 = scalar_select %p199, %s198, 3
      %s201 = smul.addr %s200, 4
      %s202 = scalar_lea.vmem %s4, %s201
      %s203 = smul.u32 2, %s15
      %v205 = vld [vmem:[%s196] sm:$0xff]
      %v206 = vld [vmem:[%s196 + $0x8] sm:$0xff]
      %v207 = vld [vmem:[%s1] sm:$0xf]
      %v208 = vld [vmem:[%s1 + $0x4] sm:$0xf]
      %v209 = vld [vmem:[%s1 + $0x8] sm:$0xf]
      %v210 = vld [vmem:[%s1 + $0xc] sm:$0xf]
      %v211 = vld [vmem:[%s1 + $0x10] sm:$0xf]
      %v212 = vld [vmem:[%s1 + $0x14] sm:$0xf]
      %v213 = vld [vmem:[%s1 + $0x18] sm:$0xf]
      %v214 = vld [vmem:[%s1 + $0x1c] sm:$0xf]
      %v215 = vld [vmem:[%s1 + $0x20] sm:$0xf]
      %v216 = vld [vmem:[%s1 + $0x24] sm:$0xf]
      %v217 = vld [vmem:[%s1 + $0x28] sm:$0xf]
      %v218 = vld [vmem:[%s1 + $0x2c] sm:$0xf]
      %v219 = vld [vmem:[%s1 + $0x30] sm:$0xf]
      %v220 = vld [vmem:[%s1 + $0x34] sm:$0xf]
      %v221 = vld [vmem:[%s1 + $0x38] sm:$0xf]
      %v222 = vld [vmem:[%s1 + $0x3c] sm:$0xf]
      %v223 = vld [vmem:[%s1 + $0x40] sm:$0xf]
      %v224 = vld [vmem:[%s1 + $0x44] sm:$0xf]
      %v225 = vld [vmem:[%s1 + $0x48] sm:$0xf]
      %v226 = vld [vmem:[%s1 + $0x4c] sm:$0xf]
      %v227 = vld [vmem:[%s1 + $0x50] sm:$0xf]
      %v228 = vld [vmem:[%s1 + $0x54] sm:$0xf]
      %v229 = vld [vmem:[%s1 + $0x58] sm:$0xf]
      %v230 = vld [vmem:[%s1 + $0x5c] sm:$0xf]
      %v231 = vld [vmem:[%s3] sm:$0x1]
      %v232 = vlaneseq
      %v233 = vshrl.u32 %v232, 7
      %v234 = vsub.s32 0, %v233
      %v235 = vrot.slane %v231, %v234
      %v238 = vunpack.c.l.b16 %v205
      %v239 = vunpack.c.h.b16 %v205
      %v240 = vunpack.c.l.b16 %v206
      %v241 = vunpack.c.h.b16 %v206
      %v242 = vpack.c.b16 %v240, %v238
      %v243 = vpack.c.b16 %v241, %v239
      %v269 = vunpack.c.l.b16 %v207
      %v270 = vunpack.c.l.b16 %v208
      %v271 = vunpack.c.l.b16 %v209
      %v272 = vunpack.c.l.b16 %v210
      %v273 = vunpack.c.l.b16 %v211
      %v274 = vunpack.c.l.b16 %v212
      %v275 = vunpack.c.l.b16 %v213
      %v276 = vunpack.c.l.b16 %v214
      %v277 = vunpack.c.l.b16 %v215
      %v278 = vunpack.c.l.b16 %v216
      %v279 = vunpack.c.l.b16 %v217
      %v280 = vunpack.c.l.b16 %v218
      %v281 = vunpack.c.l.b16 %v219
      %v282 = vunpack.c.l.b16 %v220
      %v283 = vunpack.c.l.b16 %v221
      %v284 = vunpack.c.l.b16 %v222
      %v285 = vunpack.c.l.b16 %v223
      %v286 = vunpack.c.l.b16 %v224
      %v287 = vunpack.c.l.b16 %v225
      %v288 = vunpack.c.l.b16 %v226
      %v289 = vunpack.c.l.b16 %v227
      %v290 = vunpack.c.l.b16 %v228
      %v291 = vunpack.c.l.b16 %v229
      %v292 = vunpack.c.l.b16 %v230
      %v293 = vpack.c.b16 %v270, %v269
      %v294 = vpack.c.b16 %v272, %v271
      %v295 = vpack.c.b16 %v274, %v273
      %v296 = vpack.c.b16 %v276, %v275
      %v297 = vpack.c.b16 %v278, %v277
      %v298 = vpack.c.b16 %v280, %v279
      %v299 = vpack.c.b16 %v282, %v281
      %v300 = vpack.c.b16 %v284, %v283
      %v301 = vpack.c.b16 %v286, %v285
      %v302 = vpack.c.b16 %v288, %v287
      %v303 = vpack.c.b16 %v290, %v289
      %v304 = vpack.c.b16 %v292, %v291
      %vm317 = vcmask 523264
      %v319 = vsel %vm317, %v243, 0
      %321 = vmatprep.subr.bf16.mxu0 0
      %322 = vmatpush1.bf16.msra.mxu0 %v293
      %323 = vmatprep.subr.bf16.mxu0 0
      %324 = vmatpush1.bf16.msra.mxu0 %v294
      %325 = vmatprep.subr.bf16.mxu0 0
      %326 = vmatpush1.bf16.msra.mxu0 %v295
      %327 = vmatprep.subr.bf16.mxu0 0
      %328 = vmatpush1.bf16.msra.mxu0 %v296
      %329 = vmatprep.subr.bf16.mxu0 0
      %330 = vmatpush1.bf16.msra.mxu0 %v297
      %331 = vmatprep.subr.bf16.mxu0 0
      %332 = vmatpush1.bf16.msra.mxu0 %v298
      %333 = vmatprep.subr.bf16.mxu0 0
      %334 = vmatpush1.bf16.msra.mxu0 %v299
      %335 = vmatprep.subr.bf16.mxu0 0
      %336 = vmatpush1.bf16.msra.mxu0 %v300
      %337 = vmatprep.subr.bf16.mxu0 0
      %338 = vmatpush1.bf16.msra.mxu0 %v301
      %339 = vmatprep.subr.bf16.mxu0 0
      %340 = vmatpush1.bf16.msra.mxu0 %v302
      %341 = vmatprep.subr.bf16.mxu0 0
      %342 = vmatpush1.bf16.msra.mxu0 %v303
      %343 = vmatprep.subr.bf16.mxu0 0
      %344 = vmatpush1.bf16.msra.mxu0 %v304
      %345 = vmatprep.subr.bf16.mxu0 0
      %346 = vmatpush1.bf16.msra.mxu0 0
      %347 = vmatprep.subr.bf16.mxu0 0
      %348 = vmatpush1.bf16.msra.mxu0 0
      %349 = vmatprep.subr.bf16.mxu0 0
      %350 = vmatpush1.bf16.msra.mxu0 0
      %351 = vmatprep.subr.bf16.mxu0 0
      %352 = vmatpush1.bf16.msra.mxu0 0
      %353 = vmatprep.mubr.bf16.mxu0 %v319
      %354 = vmatmul.mubr.bf16.gmra.mrb[0].mxu0 %v242
      %v355 = vpop.f32.mrb[0].mxu0
      %v356 = vadd.f32 %v235, %v355
      %v357 = vpop.f32.mrb[0].mxu0
      %v358 = vpop.f32.mrb[0].mxu0
      %v359 = vadd.f32 %v235, %v358
      %v360 = vpop.f32.mrb[0].mxu0
      %361 = vdwg.mxu0
      %v362 = vxor.u32 %v356, 2147483648
      %v363 = vxor.u32 %v359, 2147483648
      %v364 = vmul.f32 %v362, 1.442695
      %v365 = vpow.pop %v364
      %v366 = vmul.f32 %v363, 1.442695
      %v367 = vpow.pop %v366
      %v368 = vadd.f32 %v365, 1.0
      %v369 = vadd.f32 %v367, 1.0
      %v370 = vrcp.pop %v368
      %v371 = vmul.f32 1.0, %v370
      %v372 = vrcp.pop %v369
      %v373 = vmul.f32 1.0, %v372
      %v374 = vmul.f32 %v356, %v371
      %v375 = vmul.f32 %v359, %v373
      %v376 = vpack.c.bf16 %v375, %v374
      %v377 = vld [vmem:[%s2] sm:$0xf]
      %v378 = vld [vmem:[%s2 + $0x4] sm:$0xf]
      %v379 = vld [vmem:[%s2 + $0x8] sm:$0xf]
      %v380 = vld [vmem:[%s2 + $0xc] sm:$0xf]
      %v381 = vld [vmem:[%s2 + $0x10] sm:$0xf]
      %v382 = vld [vmem:[%s2 + $0x14] sm:$0xf]
      %v383 = vld [vmem:[%s2 + $0x18] sm:$0xf]
      %v384 = vld [vmem:[%s2 + $0x1c] sm:$0xf]
      %v385 = vld [vmem:[%s2 + $0x20] sm:$0xf]
      %v386 = vld [vmem:[%s2 + $0x24] sm:$0xf]
      %v387 = vld [vmem:[%s2 + $0x28] sm:$0xf]
      %v388 = vld [vmem:[%s2 + $0x2c] sm:$0xf]
      %v389 = vld [vmem:[%s2 + $0x30] sm:$0xf]
      %v390 = vld [vmem:[%s2 + $0x34] sm:$0xf]
      %v391 = vld [vmem:[%s2 + $0x38] sm:$0xf]
      %v392 = vld [vmem:[%s2 + $0x3c] sm:$0xf]
      %v393 = vld [vmem:[%s3 + $0x1] sm:$0x1]
      %v394 = vlaneseq
      %v395 = vshrl.u32 %v394, 7
      %v396 = vsub.s32 0, %v395
      %v397 = vrot.slane %v393, %v396
      %v414 = vunpack.c.l.b16 %v377
      %v415 = vunpack.c.l.b16 %v378
      %v416 = vunpack.c.l.b16 %v379
      %v417 = vunpack.c.l.b16 %v380
      %v418 = vunpack.c.l.b16 %v381
      %v419 = vunpack.c.l.b16 %v382
      %v420 = vunpack.c.l.b16 %v383
      %v421 = vunpack.c.l.b16 %v384
      %v422 = vunpack.c.l.b16 %v385
      %v423 = vunpack.c.l.b16 %v386
      %v424 = vunpack.c.l.b16 %v387
      %v425 = vunpack.c.l.b16 %v388
      %v426 = vunpack.c.l.b16 %v389
      %v427 = vunpack.c.l.b16 %v390
      %v428 = vunpack.c.l.b16 %v391
      %v429 = vunpack.c.l.b16 %v392
      %v430 = vpack.c.b16 %v415, %v414
      %v431 = vpack.c.b16 %v417, %v416
      %v432 = vpack.c.b16 %v419, %v418
      %v433 = vpack.c.b16 %v421, %v420
      %v434 = vpack.c.b16 %v423, %v422
      %v435 = vpack.c.b16 %v425, %v424
      %v436 = vpack.c.b16 %v427, %v426
      %v437 = vpack.c.b16 %v429, %v428
      %446 = vmatprep.subr.bf16.mxu0 0
      %447 = vmatpush1.bf16.msra.mxu0 %v430
      %448 = vmatprep.subr.bf16.mxu0 0
      %449 = vmatpush1.bf16.msra.mxu0 %v431
      %450 = vmatprep.subr.bf16.mxu0 0
      %451 = vmatpush1.bf16.msra.mxu0 %v432
      %452 = vmatprep.subr.bf16.mxu0 0
      %453 = vmatpush1.bf16.msra.mxu0 %v433
      %454 = vmatprep.subr.bf16.mxu0 0
      %455 = vmatpush1.bf16.msra.mxu0 %v434
      %456 = vmatprep.subr.bf16.mxu0 0
      %457 = vmatpush1.bf16.msra.mxu0 %v435
      %458 = vmatprep.subr.bf16.mxu0 0
      %459 = vmatpush1.bf16.msra.mxu0 %v436
      %460 = vmatprep.subr.bf16.mxu0 0
      %461 = vmatpush1.bf16.msra.mxu0 %v437
      %462 = vmatprep.subr.bf16.mxu0 0
      %463 = vmatpush1.bf16.msra.mxu0 0
      %464 = vmatprep.subr.bf16.mxu0 0
      %465 = vmatpush1.bf16.msra.mxu0 0
      %466 = vmatprep.subr.bf16.mxu0 0
      %467 = vmatpush1.bf16.msra.mxu0 0
      %468 = vmatprep.subr.bf16.mxu0 0
      %469 = vmatpush1.bf16.msra.mxu0 0
      %470 = vmatprep.subr.bf16.mxu0 0
      %471 = vmatpush1.bf16.msra.mxu0 0
      %472 = vmatprep.subr.bf16.mxu0 0
      %473 = vmatpush1.bf16.msra.mxu0 0
      %474 = vmatprep.subr.bf16.mxu0 0
      %475 = vmatpush1.bf16.msra.mxu0 0
      %476 = vmatprep.subr.bf16.mxu0 0
      %477 = vmatpush1.bf16.msra.mxu0 0
      %478 = vmatprep.mubr.bf16.mxu0 0
      %479 = vmatmul.mubr.bf16.gmra.mrb[0].mxu0 %v376
      %v480 = vpop.f32.mrb[0].mxu0
      %v481 = vadd.f32 %v397, %v480
      %v482 = vpop.f32.mrb[0].mxu0
      %v483 = vpop.f32.mrb[0].mxu0
      %v484 = vadd.f32 %v397, %v483
      %v485 = vpop.f32.mrb[0].mxu0
      %486 = vdwg.mxu0
      %v487 = vpack.c.bf16 %v484, %v481
      %v489 = vunpack.c.l.b16 %v487
      %v490 = vunpack.c.h.b16 %v487
      %v491 = vpack.c.b16 %v489, %v489
      %v492 = vpack.c.b16 %v490, %v490
      %495 = vst [vmem:[%s202] sm:$0xf] %v491
      %496 = vst [vmem:[%s202 + $0x4] sm:$0xf] %v492
      %s497 = smul.u32 2, %s15
      %p498 = scmp.lt.s32.totalorder %s497, 3
      %s499 = scalar_select %p498, %s497, 3
      %s500 = smul.addr %s499, 4
      %s501 = scalar_lea.vmem %s4, %s500
      // Predicated region
      $region37: #{yolo11_forward.1} parent=35 // pred_check
        %p502 = pneg %p122
      $region38: #{yolo11_forward.1} parent=35 // pred_check_branch
        %504 = sbr.rel (%p502) target = $region40
      $region39: #{yolo11_forward.1} parent=35 // pred_region
        %s505 = smul.u32 2, %s15
      $region40: #{yolo11_forward.1} parent=35 // pred_fallthru
        _
    $region36: #{yolo11_forward.1} parent=5 // pred_fallthru
      _
    %p506 = scmp.le.s32.totalorder 2, %s10
    // Predicated region
    $region41: #{yolo11_forward.1} parent=5 // pred_check
      %p507 = pneg %p506
    $region42: #{yolo11_forward.1} parent=5 // pred_check_branch
      %509 = sbr.rel (%p507) target = $region44
    $region43: #{yolo11_forward.1} parent=5 // pred_region
      %s510 = ssub.s32 %s10, 2
      // Predicated region
      $region45: #{yolo11_forward.1} parent=43 // pred_check
        %p511 = pneg %p128
      $region46: #{yolo11_forward.1} parent=43 // pred_check_branch
        %513 = sbr.rel (%p511) target = $region48
      $region47: #{yolo11_forward.1} parent=43 // pred_region
        %s514 = smul.u32 2, %s16
        %p515 = scmp.lt.s32.totalorder %s514, 3
        %s516 = scalar_select %p515, %s514, 3
        %s517 = smul.addr %s516, 4
        %s518 = scalar_lea.vmem %s4, %s517
      $region48: #{yolo11_forward.1} parent=43 // pred_fallthru
        _
    $region44: #{yolo11_forward.1} parent=5 // pred_fallthru
      _
  $region6: #{yolo11_forward.1} parent=0 // loop_footer
    %s14 = sadd.s32 1, %s10
  $region7: #{yolo11_forward.1} parent=0 // loop_footer_branch
    %9 = sbr.rel target = $region3
  $region8: #{yolo11_forward.1} parent=0 // loop_exit
    _

</llo_original>
